<compile_context>
chip_gen: v7x
topology: tpu7x:2x2x1
jax: 0.10.0
libtpu: 0.0.40
codegen_flags: <defaults>
</compile_context>

<pallas_src>
import jax
import jax.numpy as jnp
from jax import lax
from jax.experimental import pallas as pl
from jax.experimental.pallas import tpu as pltpu

_LANE = 128
_SUBLANE = 8
_EPS = 1e-5


def _round_up(n, m):
    return ((n + m - 1) // m) * m


# ------------------------------ fused kernel ------------------------------

def _make_fused_mlp_kernel(n_hidden, true_hidden_dims):
    """Builds kernel(x_ref, w0, bgb0, ..., w_{n-1}, bgb_{n-1}, wf, bf, o_ref).

    w*   : bf16 [Din_pad, Dout_pad]   (pre-transposed, zero-padded)
    bgb* : f32  [3, Dout_pad]         rows = (bias, gamma, beta), zero-padded
    wf   : bf16 [Dh_pad, C_pad]
    bf   : f32  [1, C_pad]
    """

    def kernel(*args):
        x_ref = args[0]
        o_ref = args[-1]
        prefs = args[1:-1]

        h = x_ref[...].astype(jnp.float32)                     # [bt, Din_pad]

        for li in range(n_hidden):
            w = prefs[2 * li][...]                             # bf16 [Din_p, Dout_p]
            bgb = prefs[2 * li + 1][...]                       # f32  [3, Dout_p]
            b, g, beta = bgb[0:1, :], bgb[1:2, :], bgb[2:3, :]

            # Linear (MXU): bf16 operands, f32 accumulation, no in-kernel transpose.
            y = lax.dot_general(
                h.astype(jnp.bfloat16), w,
                dimension_numbers=(((1,), (0,)), ((), ())),
                preferred_element_type=jnp.float32) + b        # [bt, Dout_p]

            # LayerNorm over the TRUE feature dim.  Padded lanes of y are exactly 0
            # (weight columns / bias entries there are 0) so the sum is exact; the
            # variance masks (y - mu) on padded lanes before squaring.
            d_true = int(true_hidden_dims[li])
            d_pad = y.shape[-1]
            inv_d = 1.0 / float(d_true)
            mu = jnp.sum(y, axis=-1, keepdims=True) * inv_d
            diff = y - mu
            if d_true != d_pad:
                mask = (lax.broadcasted_iota(jnp.int32, (1, d_pad), 1)
                        < d_true).astype(jnp.float32)
                diff = diff * mask                             # zero padded lanes
            var = jnp.sum(diff * diff, axis=-1, keepdims=True) * inv_d
            y_hat = diff * lax.rsqrt(var + _EPS) * g + beta    # padded lanes -> 0

            # ReLU (f32 VPU path, v5e-safe).  Dropout == identity in eval mode.
            h = jnp.maximum(y_hat, 0.0)

        # Final Linear.
        wf = prefs[2 * n_hidden][...]                          # bf16 [Dh_p, C_p]
        bf = prefs[2 * n_hidden + 1][...]                      # f32  [1, C_p]
        y = lax.dot_general(
            h.astype(jnp.bfloat16), wf,
            dimension_numbers=(((1,), (0,)), ((), ())),
            preferred_element_type=jnp.float32) + bf
        o_ref[...] = y.astype(o_ref.dtype)

    return kernel


# --------------------------- parameter handling ---------------------------

def init_unified_classifier(key, in_features, hidden_dims, num_classes):
    """Matches PyTorch _initialize_weights:
       Linear: kaiming_normal_(mode='fan_out', relu) -> std = sqrt(2/out_features), bias = 0
       LayerNorm: default gamma=1, beta=0 (the BatchNorm1d branch never fires)."""
    if not isinstance(hidden_dims, (list, tuple)):
        hidden_dims = [hidden_dims]
    params = {"hidden": [], "final": None}
    prev = in_features
    for dim in hidden_dims:
        key, k = jax.random.split(key)
        std = (2.0 / dim) ** 0.5  # fan_out = out_features for nn.Linear
        w = std * jax.random.normal(k, (dim, prev), dtype=jnp.float32)
        params["hidden"].append((w,
                                 jnp.zeros((dim,), jnp.float32),   # bias
                                 jnp.ones((dim,), jnp.float32),    # gamma
                                 jnp.zeros((dim,), jnp.float32)))  # beta
        prev = dim
    key, k = jax.random.split(key)
    std = (2.0 / num_classes) ** 0.5
    wf = std * jax.random.normal(k, (num_classes, prev), dtype=jnp.float32)
    params["final"] = (wf, jnp.zeros((num_classes,), jnp.float32))
    return params


def prepare_padded_params(params, in_features):
    """Pre-transpose weights to [Din_pad, Dout_pad] bf16, pad feature dims to 128,
    and pack (bias, gamma, beta) into one [3, Dout_pad] f32 array per hidden layer."""
    prev_true = in_features
    prev_p = _round_up(in_features, _LANE)
    hidden = []
    true_hidden = []
    for (w, b, g, beta) in params["hidden"]:
        dout = w.shape[0]
        dout_p = _round_up(dout, _LANE)
        wt = jnp.zeros((prev_p, dout_p), jnp.bfloat16)
        wt = wt.at[:prev_true, :dout].set(w.T.astype(jnp.bfloat16))
        bgb = jnp.zeros((3, dout_p), jnp.float32)
        bgb = bgb.at[0, :dout].set(b)
        bgb = bgb.at[1, :dout].set(g)
        bgb = bgb.at[2, :dout].set(beta)
        hidden.append((wt, bgb))
        true_hidden.append(dout)
        prev_true, prev_p = dout, dout_p

    wf, bf = params["final"]
    c = wf.shape[0]
    c_p = _round_up(c, _LANE)
    wft = jnp.zeros((prev_p, c_p), jnp.bfloat16)
    wft = wft.at[:prev_true, :c].set(wf.T.astype(jnp.bfloat16))
    bfp = jnp.zeros((1, c_p), jnp.float32).at[0, :c].set(bf)

    return {"hidden": hidden, "final": (wft, bfp),
            "true_hidden": true_hidden,
            "in_features": in_features, "num_classes": c}


# ------------------------------ forward pass ------------------------------

def unified_classifier_forward(padded_params, x, *, batch_tile=256):
    B, din = x.shape
    din_p = _round_up(din, _LANE)
    c = padded_params["num_classes"]
    wft, bfp = padded_params["final"]
    c_p = wft.shape[1]

    # Pad batch to a sublane multiple; tile it across a grid axis if large.
    bp = _round_up(max(B, _SUBLANE), _SUBLANE)
    if bp > batch_tile:
        bp = _round_up(bp, batch_tile)
        bt = batch_tile
    else:
        bt = bp

    xp = jnp.zeros((bp, din_p), jnp.float32).at[:B, :din].set(x.astype(jnp.float32))

    n_hidden = len(padded_params["hidden"])
    kernel = _make_fused_mlp_kernel(n_hidden, tuple(padded_params["true_hidden"]))

    flat_params = []
    in_specs = [pl.BlockSpec((bt, din_p), lambda i: (i, 0))]
    for (wt, bgb) in padded_params["hidden"]:
        flat_params += [wt, bgb]
        in_specs += [pl.BlockSpec(wt.shape, lambda i: (0, 0)),
                     pl.BlockSpec(bgb.shape, lambda i: (0, 0))]
    flat_params += [wft, bfp]
    in_specs += [pl.BlockSpec(wft.shape, lambda i: (0, 0)),
                 pl.BlockSpec(bfp.shape, lambda i: (0, 0))]

    # Advisory cost estimate for the whole fused call.
    flops = 0
    bytes_accessed = xp.size * 4
    for (wt, bgb) in padded_params["hidden"]:
        flops += 2 * bp * wt.shape[0] * wt.shape[1] + 10 * bp * wt.shape[1]
        bytes_accessed += wt.size * 2 + bgb.size * 4
    flops += 2 * bp * wft.shape[0] * wft.shape[1]
    bytes_accessed += wft.size * 2 + bfp.size * 4 + bp * c_p * 4
    transcendentals = bp * n_hidden  # one rsqrt per row per LayerNorm

    out_p = pl.pallas_call(
        kernel,
        out_shape=jax.ShapeDtypeStruct((bp, c_p), jnp.float32),
        grid=(bp // bt,),
        in_specs=in_specs,
        out_specs=pl.BlockSpec((bt, c_p), lambda i: (i, 0)),
        compiler_params=pltpu.CompilerParams(
            dimension_semantics=("parallel",)),
        cost_estimate=pl.CostEstimate(flops=flops,
                                      transcendentals=transcendentals,
                                      bytes_accessed=bytes_accessed),
    )(xp, *flat_params)

    return out_p[:B, :c]


# ---------------------------------- main ----------------------------------

if __name__ == "__main__":
    key = jax.random.PRNGKey(0)
    batch = 2
    in_features = 32
    hidden_dims = [64, 32]
    num_classes = 10

    key, kx = jax.random.split(key)
    x = jax.random.normal(kx, (batch, in_features), dtype=jnp.float32)

    params = init_unified_classifier(key, in_features, hidden_dims, num_classes)
    padded = prepare_padded_params(params, in_features)

    out = unified_classifier_forward(padded, x)
    out = jax.block_until_ready(out)

    # Pure-JAX reference with the same bf16-matmul / f32-LayerNorm math.
    def ref_forward(params, x):
        h = x
        for (w, b, g, beta) in params["hidden"]:
            y = jnp.dot(h.astype(jnp.bfloat16), w.astype(jnp.bfloat16).T,
                        preferred_element_type=jnp.float32) + b
            mu = jnp.mean(y, axis=-1, keepdims=True)
            var = jnp.mean((y - mu) ** 2, axis=-1, keepdims=True)
            h = jnp.maximum((y - mu) / jnp.sqrt(var + _EPS) * g + beta, 0.0)
        wf, bf = params["final"]
        return jnp.dot(h.astype(jnp.bfloat16), wf.astype(jnp.bfloat16).T,
                       preferred_element_type=jnp.float32) + bf

    ref = ref_forward(params, x)
    assert out.shape == (batch, num_classes)
    max_diff = float(jnp.max(jnp.abs(out - ref)))
    assert jnp.allclose(out, ref, atol=2e-2, rtol=2e-2), f"max abs diff = {max_diff}"

    print("KERNEL_OK")
</pallas_src>

<mosaic_0001>
module attributes {stable_mosaic.version = 11 : i64} {
  func.func @kernel(%arg0: i32, %arg1: memref<8x128xf32, #tpu.memory_space<vmem>>, %arg2: memref<128x128xbf16, #tpu.memory_space<vmem>>, %arg3: memref<3x128xf32, #tpu.memory_space<vmem>>, %arg4: memref<128x128xbf16, #tpu.memory_space<vmem>>, %arg5: memref<3x128xf32, #tpu.memory_space<vmem>>, %arg6: memref<128x128xbf16, #tpu.memory_space<vmem>>, %arg7: memref<1x128xf32, #tpu.memory_space<vmem>>, %arg8: memref<8x128xf32, #tpu.memory_space<vmem>>) attributes {dimension_semantics = [#tpu.dimension_semantics<parallel>], iteration_bounds = array<i64: 1>, scalar_prefetch = 0 : i64, scratch_operands = 0 : i64, tpu.core_type = #tpu.core_type<tc>, window_params = [{transform_indices = @transform_0, window_bounds = array<i64: 8, 128>}, {pipeline_mode = #tpu.pipeline_mode<synchronous>, transform_indices = @transform_1, window_bounds = array<i64: 128, 128>}, {pipeline_mode = #tpu.pipeline_mode<synchronous>, transform_indices = @transform_2, window_bounds = array<i64: 3, 128>}, {pipeline_mode = #tpu.pipeline_mode<synchronous>, transform_indices = @transform_3, window_bounds = array<i64: 128, 128>}, {pipeline_mode = #tpu.pipeline_mode<synchronous>, transform_indices = @transform_4, window_bounds = array<i64: 3, 128>}, {pipeline_mode = #tpu.pipeline_mode<synchronous>, transform_indices = @transform_5, window_bounds = array<i64: 128, 128>}, {pipeline_mode = #tpu.pipeline_mode<synchronous>, transform_indices = @transform_6, window_bounds = array<i64: 1, 128>}, {transform_indices = @transform_7, window_bounds = array<i64: 8, 128>}]} {
    %c0 = arith.constant 0 : index
    %c0_0 = arith.constant 0 : index
    %0 = vector.load %arg1[%c0, %c0_0] : memref<8x128xf32, #tpu.memory_space<vmem>>, vector<8x128xf32>
    %c0_1 = arith.constant 0 : index
    %c0_2 = arith.constant 0 : index
    %1 = vector.load %arg2[%c0_1, %c0_2] : memref<128x128xbf16, #tpu.memory_space<vmem>>, vector<128x128xbf16>
    %c0_3 = arith.constant 0 : index
    %c0_4 = arith.constant 0 : index
    %2 = vector.load %arg3[%c0_3, %c0_4] : memref<3x128xf32, #tpu.memory_space<vmem>>, vector<3x128xf32>
    %3 = vector.extract_strided_slice %2 {offsets = [0, 0], sizes = [1, 128], strides = [1, 1]} : vector<3x128xf32> to vector<1x128xf32>
    %4 = vector.extract_strided_slice %2 {offsets = [1, 0], sizes = [1, 128], strides = [1, 1]} : vector<3x128xf32> to vector<1x128xf32>
    %5 = vector.extract_strided_slice %2 {offsets = [2, 0], sizes = [1, 128], strides = [1, 1]} : vector<3x128xf32> to vector<1x128xf32>
    %6 = arith.truncf %0 : vector<8x128xf32> to vector<8x128xbf16>
    %cst = arith.constant dense<0.000000e+00> : vector<8x128xf32>
    %7 = tpu.matmul %6, %1, %cst {dimension_numbers = #tpu.dot_dimension_numbers<[1], [0], [0], [1], [0, 0, 1, 1], [], []>} : vector<8x128xbf16>, vector<128x128xbf16>, vector<8x128xf32> -> vector<8x128xf32>
    %8 = vector.broadcast %3 : vector<1x128xf32> to vector<8x128xf32>
    %9 = arith.addf %7, %8 : vector<8x128xf32>
    %cst_5 = arith.constant dense<0.000000e+00> : vector<8xf32>
    %10 = vector.multi_reduction <add>, %9, %cst_5 [1] : vector<8x128xf32> to vector<8xf32>
    %11 = vector.shape_cast %10 : vector<8xf32> to vector<8x1xf32>
    %cst_6 = arith.constant 1.562500e-02 : f32
    %12 = vector.broadcast %cst_6 : f32 to vector<8x1xf32>
    %13 = arith.mulf %11, %12 : vector<8x1xf32>
    %14 = vector.broadcast %13 : vector<8x1xf32> to vector<8x128xf32>
    %15 = arith.subf %9, %14 : vector<8x128xf32>
    %16 = tpu.iota {dimensions = array<i32: 1>} : vector<1x128xi32>
    %c64_i32 = arith.constant 64 : i32
    %17 = vector.broadcast %c64_i32 : i32 to vector<1x128xi32>
    %18 = arith.cmpi slt, %16, %17 : vector<1x128xi32>
    %19 = arith.extui %18 : vector<1x128xi1> to vector<1x128xi32>
    %20 = arith.sitofp %19 : vector<1x128xi32> to vector<1x128xf32>
    %21 = vector.broadcast %20 : vector<1x128xf32> to vector<8x128xf32>
    %22 = arith.mulf %15, %21 : vector<8x128xf32>
    %23 = arith.mulf %22, %22 : vector<8x128xf32>
    %cst_7 = arith.constant dense<0.000000e+00> : vector<8xf32>
    %24 = vector.multi_reduction <add>, %23, %cst_7 [1] : vector<8x128xf32> to vector<8xf32>
    %25 = vector.shape_cast %24 : vector<8xf32> to vector<8x1xf32>
    %cst_8 = arith.constant 1.562500e-02 : f32
    %26 = vector.broadcast %cst_8 : f32 to vector<8x1xf32>
    %27 = arith.mulf %25, %26 : vector<8x1xf32>
    %cst_9 = arith.constant 9.99999974E-6 : f32
    %28 = vector.broadcast %cst_9 : f32 to vector<8x1xf32>
    %29 = arith.addf %27, %28 : vector<8x1xf32>
    %30 = math.rsqrt %29 : vector<8x1xf32>
    %31 = vector.broadcast %30 : vector<8x1xf32> to vector<8x128xf32>
    %32 = arith.mulf %22, %31 : vector<8x128xf32>
    %33 = vector.broadcast %4 : vector<1x128xf32> to vector<8x128xf32>
    %34 = arith.mulf %32, %33 : vector<8x128xf32>
    %35 = vector.broadcast %5 : vector<1x128xf32> to vector<8x128xf32>
    %36 = arith.addf %34, %35 : vector<8x128xf32>
    %cst_10 = arith.constant 0.000000e+00 : f32
    %37 = vector.broadcast %cst_10 : f32 to vector<8x128xf32>
    %38 = arith.maximumf %36, %37 : vector<8x128xf32>
    %c0_11 = arith.constant 0 : index
    %c0_12 = arith.constant 0 : index
    %39 = vector.load %arg4[%c0_11, %c0_12] : memref<128x128xbf16, #tpu.memory_space<vmem>>, vector<128x128xbf16>
    %c0_13 = arith.constant 0 : index
    %c0_14 = arith.constant 0 : index
    %40 = vector.load %arg5[%c0_13, %c0_14] : memref<3x128xf32, #tpu.memory_space<vmem>>, vector<3x128xf32>
    %41 = vector.extract_strided_slice %40 {offsets = [0, 0], sizes = [1, 128], strides = [1, 1]} : vector<3x128xf32> to vector<1x128xf32>
    %42 = vector.extract_strided_slice %40 {offsets = [1, 0], sizes = [1, 128], strides = [1, 1]} : vector<3x128xf32> to vector<1x128xf32>
    %43 = vector.extract_strided_slice %40 {offsets = [2, 0], sizes = [1, 128], strides = [1, 1]} : vector<3x128xf32> to vector<1x128xf32>
    %44 = arith.truncf %38 : vector<8x128xf32> to vector<8x128xbf16>
    %cst_15 = arith.constant dense<0.000000e+00> : vector<8x128xf32>
    %45 = tpu.matmul %44, %39, %cst_15 {dimension_numbers = #tpu.dot_dimension_numbers<[1], [0], [0], [1], [0, 0, 1, 1], [], []>} : vector<8x128xbf16>, vector<128x128xbf16>, vector<8x128xf32> -> vector<8x128xf32>
    %46 = vector.broadcast %41 : vector<1x128xf32> to vector<8x128xf32>
    %47 = arith.addf %45, %46 : vector<8x128xf32>
    %cst_16 = arith.constant dense<0.000000e+00> : vector<8xf32>
    %48 = vector.multi_reduction <add>, %47, %cst_16 [1] : vector<8x128xf32> to vector<8xf32>
    %49 = vector.shape_cast %48 : vector<8xf32> to vector<8x1xf32>
    %cst_17 = arith.constant 3.125000e-02 : f32
    %50 = vector.broadcast %cst_17 : f32 to vector<8x1xf32>
    %51 = arith.mulf %49, %50 : vector<8x1xf32>
    %52 = vector.broadcast %51 : vector<8x1xf32> to vector<8x128xf32>
    %53 = arith.subf %47, %52 : vector<8x128xf32>
    %54 = tpu.iota {dimensions = array<i32: 1>} : vector<1x128xi32>
    %c32_i32 = arith.constant 32 : i32
    %55 = vector.broadcast %c32_i32 : i32 to vector<1x128xi32>
    %56 = arith.cmpi slt, %54, %55 : vector<1x128xi32>
    %57 = arith.extui %56 : vector<1x128xi1> to vector<1x128xi32>
    %58 = arith.sitofp %57 : vector<1x128xi32> to vector<1x128xf32>
    %59 = vector.broadcast %58 : vector<1x128xf32> to vector<8x128xf32>
    %60 = arith.mulf %53, %59 : vector<8x128xf32>
    %61 = arith.mulf %60, %60 : vector<8x128xf32>
    %cst_18 = arith.constant dense<0.000000e+00> : vector<8xf32>
    %62 = vector.multi_reduction <add>, %61, %cst_18 [1] : vector<8x128xf32> to vector<8xf32>
    %63 = vector.shape_cast %62 : vector<8xf32> to vector<8x1xf32>
    %cst_19 = arith.constant 3.125000e-02 : f32
    %64 = vector.broadcast %cst_19 : f32 to vector<8x1xf32>
    %65 = arith.mulf %63, %64 : vector<8x1xf32>
    %cst_20 = arith.constant 9.99999974E-6 : f32
    %66 = vector.broadcast %cst_20 : f32 to vector<8x1xf32>
    %67 = arith.addf %65, %66 : vector<8x1xf32>
    %68 = math.rsqrt %67 : vector<8x1xf32>
    %69 = vector.broadcast %68 : vector<8x1xf32> to vector<8x128xf32>
    %70 = arith.mulf %60, %69 : vector<8x128xf32>
    %71 = vector.broadcast %42 : vector<1x128xf32> to vector<8x128xf32>
    %72 = arith.mulf %70, %71 : vector<8x128xf32>
    %73 = vector.broadcast %43 : vector<1x128xf32> to vector<8x128xf32>
    %74 = arith.addf %72, %73 : vector<8x128xf32>
    %cst_21 = arith.constant 0.000000e+00 : f32
    %75 = vector.broadcast %cst_21 : f32 to vector<8x128xf32>
    %76 = arith.maximumf %74, %75 : vector<8x128xf32>
    %c0_22 = arith.constant 0 : index
    %c0_23 = arith.constant 0 : index
    %77 = vector.load %arg6[%c0_22, %c0_23] : memref<128x128xbf16, #tpu.memory_space<vmem>>, vector<128x128xbf16>
    %c0_24 = arith.constant 0 : index
    %c0_25 = arith.constant 0 : index
    %78 = vector.load %arg7[%c0_24, %c0_25] : memref<1x128xf32, #tpu.memory_space<vmem>>, vector<1x128xf32>
    %79 = arith.truncf %76 : vector<8x128xf32> to vector<8x128xbf16>
    %cst_26 = arith.constant dense<0.000000e+00> : vector<8x128xf32>
    %80 = tpu.matmul %79, %77, %cst_26 {dimension_numbers = #tpu.dot_dimension_numbers<[1], [0], [0], [1], [0, 0, 1, 1], [], []>} : vector<8x128xbf16>, vector<128x128xbf16>, vector<8x128xf32> -> vector<8x128xf32>
    %81 = vector.broadcast %78 : vector<1x128xf32> to vector<8x128xf32>
    %82 = arith.addf %80, %81 : vector<8x128xf32>
    %c0_27 = arith.constant 0 : index
    %c0_28 = arith.constant 0 : index
    %83 = vector.load %arg8[%c0_27, %c0_28] : memref<8x128xf32, #tpu.memory_space<vmem>>, vector<8x128xf32>
    tpu.vector_store %arg8[%c0_27, %c0_28], %82 {strides = array<i32>} : memref<8x128xf32, #tpu.memory_space<vmem>>, vector<8x128xf32>,
    return
  }
  func.func @transform_0(%arg0: i32) -> (i32, i32) {
    %c0_i32 = arith.constant 0 : i32
    %c0_i32_0 = arith.constant 0 : i32
    return %arg0, %c0_i32 : i32, i32
  }
  func.func @transform_1(%arg0: i32) -> (i32, i32) {
    %c0_i32 = arith.constant 0 : i32
    %c0_i32_0 = arith.constant 0 : i32
    %c0_i32_1 = arith.constant 0 : i32
    return %c0_i32, %c0_i32_0 : i32, i32
  }
  func.func @transform_2(%arg0: i32) -> (i32, i32) {
    %c0_i32 = arith.constant 0 : i32
    %c0_i32_0 = arith.constant 0 : i32
    %c0_i32_1 = arith.constant 0 : i32
    return %c0_i32, %c0_i32_0 : i32, i32
  }
  func.func @transform_3(%arg0: i32) -> (i32, i32) {
    %c0_i32 = arith.constant 0 : i32
    %c0_i32_0 = arith.constant 0 : i32
    %c0_i32_1 = arith.constant 0 : i32
    return %c0_i32, %c0_i32_0 : i32, i32
  }
  func.func @transform_4(%arg0: i32) -> (i32, i32) {
    %c0_i32 = arith.constant 0 : i32
    %c0_i32_0 = arith.constant 0 : i32
    %c0_i32_1 = arith.constant 0 : i32
    return %c0_i32, %c0_i32_0 : i32, i32
  }
  func.func @transform_5(%arg0: i32) -> (i32, i32) {
    %c0_i32 = arith.constant 0 : i32
    %c0_i32_0 = arith.constant 0 : i32
    %c0_i32_1 = arith.constant 0 : i32
    return %c0_i32, %c0_i32_0 : i32, i32
  }
  func.func @transform_6(%arg0: i32) -> (i32, i32) {
    %c0_i32 = arith.constant 0 : i32
    %c0_i32_0 = arith.constant 0 : i32
    %c0_i32_1 = arith.constant 0 : i32
    return %c0_i32, %c0_i32_0 : i32, i32
  }
  func.func @transform_7(%arg0: i32) -> (i32, i32) {
    %c0_i32 = arith.constant 0 : i32
    %c0_i32_0 = arith.constant 0 : i32
    return %arg0, %c0_i32 : i32, i32
  }
}

</mosaic_0001>

<llo_original>
// kernel: tpu_custom_call.1
$region0: #{tpu_custom_call.1}
  #allocation0 [shape = 'u32[]', space=smem, size = 0x4, offset = 0x4, fixed_abs, tag = 'smem constant byte address 0x4 - core index']
  #allocation1 [shape = 'u32[144,128]{1,0:T(1,128)}', space=vmem, size = 0x12000, scoped, tag = 'internal scratch']
  %s0 = inlined_call_operand.hbm [shape: f32[8,128], index: 0, kind: input, shape index: {}]
  %s1 = inlined_call_operand.hbm [shape: bf16[128,128], index: 1, kind: input, shape index: {}]
  %s2 = inlined_call_operand.vmem [shape: f32[3,128], index: 2, kind: input, shape index: {}]
  %s3 = inlined_call_operand.hbm [shape: bf16[128,128], index: 3, kind: input, shape index: {}]
  %s4 = inlined_call_operand.vmem [shape: f32[3,128], index: 4, kind: input, shape index: {}]
  %s5 = inlined_call_operand.hbm [shape: bf16[128,128], index: 5, kind: input, shape index: {}]
  %s6 = inlined_call_operand.vmem [shape: f32[1,128], index: 6, kind: input, shape index: {}]
  %s7 = inlined_call_operand.hbm [shape: f32[8,128], index: 7, kind: output, shape index: {}]
  %s8 = sld [smem:[#allocation0]]
  $region54: #{tpu_custom_call.1} parent=0
    _
  %s10 = ssub.s32 1, %s8
  %s11 = scalar_select 0, %s10, %s8
  $region1: #{tpu_custom_call.1} parent=0
    #allocation2 [shape = 'u8[4096]{0}', space=vmem, size = 0x1000, scoped, tag = 'input window, operand 0, single buffered']
    #allocation3 [shape = 's32[1]{0}', space=sflag, size = 0x4, scoped, tag = 'scoped memory for tpu_custom_call.1']
    #allocation4 [shape = 's32[1]{0}', space=sflag, size = 0x4, scoped, tag = 'scoped memory for tpu_custom_call.1']
    #allocation5 [shape = 'u8[32768]{0}', space=vmem, size = 0x8000, scoped, tag = 'input window, operand 1, single buffered']
    #allocation6 [shape = 's32[1]{0}', space=sflag, size = 0x4, scoped, tag = 'scoped memory for tpu_custom_call.1']
    #allocation7 [shape = 'u8[32768]{0}', space=vmem, size = 0x8000, scoped, tag = 'input window, operand 3, single buffered']
    #allocation8 [shape = 'u8[32768]{0}', space=vmem, size = 0x8000, scoped, tag = 'input window, operand 5, single buffered']
    #allocation9 [shape = 's32[1]{0}', space=sflag, size = 0x4, scoped, tag = 'scoped memory for tpu_custom_call.1']
    #allocation10 [shape = 'u8[4096]{0}', space=vmem, size = 0x1000, scoped, tag = 'output window, operand 0, single buffered']
    %12 = vsyncpa [#allocation3], 0
    %13 = vsyncpa [#allocation6], 0
    %14 = vsyncpa [#allocation9], 0
    %15 = vsyncpa [#allocation4], 0
    // Predicated region
    $region2: #{tpu_custom_call.1} parent=1 // pred_check
      _
    $region3: #{tpu_custom_call.1} parent=1 // pred_check_branch
      %17 = sbr.rel (0) target = $region5
    $region4: #{tpu_custom_call.1} parent=1 // pred_region
      %s19 = ssub.s32 128, 128
      %20 = vsyncadd [#allocation3], %s19
      %s22 = sshll.u32 [#allocation2], 4
      %s23 = int_to_ptr.vmem [resolvable:$true] %s22
      %25 = dma.hbm_to_vmem [thread:$0]  %s0, 128, %s23, [#allocation3]
    $region5: #{tpu_custom_call.1} parent=1 // pred_fallthru
      _
    // Predicated region
    $region6: #{tpu_custom_call.1} parent=1 // pred_check
      _
    $region7: #{tpu_custom_call.1} parent=1 // pred_check_branch
      %27 = sbr.rel (0) target = $region9
    $region8: #{tpu_custom_call.1} parent=1 // pred_region
      %s29 = ssub.s32 1024, 1024
      %30 = vsyncadd [#allocation6], %s29
      %s31 = sshll.u32 [#allocation5], 4
      %s32 = int_to_ptr.vmem [resolvable:$true] %s31
      %37 = dma.hbm_to_vmem [thread:$0]  %s1, 1024, %s32, [#allocation6], 64, 64, 4
    $region9: #{tpu_custom_call.1} parent=1 // pred_fallthru
      _
    // Predicated region
    $region10: #{tpu_custom_call.1} parent=1 // pred_check
      _
    $region11: #{tpu_custom_call.1} parent=1 // pred_check_branch
      %39 = sbr.rel (0) target = $region13
    $region12: #{tpu_custom_call.1} parent=1 // pred_region
      _
    $region13: #{tpu_custom_call.1} parent=1 // pred_fallthru
      _
    // Predicated region
    $region14: #{tpu_custom_call.1} parent=1 // pred_check
      _
    $region15: #{tpu_custom_call.1} parent=1 // pred_check_branch
      %41 = sbr.rel (0) target = $region17
    $region16: #{tpu_custom_call.1} parent=1 // pred_region
      %s43 = ssub.s32 1024, 1024
      %44 = vsyncadd [#allocation6], %s43
      %s45 = sshll.u32 [#allocation7], 4
      %s46 = int_to_ptr.vmem [resolvable:$true] %s45
      %51 = dma.hbm_to_vmem [thread:$0]  %s3, 1024, %s46, [#allocation6], 64, 64, 4
    $region17: #{tpu_custom_call.1} parent=1 // pred_fallthru
      _
    // Predicated region
    $region18: #{tpu_custom_call.1} parent=1 // pred_check
      _
    $region19: #{tpu_custom_call.1} parent=1 // pred_check_branch
      %53 = sbr.rel (0) target = $region21
    $region20: #{tpu_custom_call.1} parent=1 // pred_region
      _
    $region21: #{tpu_custom_call.1} parent=1 // pred_fallthru
      _
    // Predicated region
    $region22: #{tpu_custom_call.1} parent=1 // pred_check
      _
    $region23: #{tpu_custom_call.1} parent=1 // pred_check_branch
      %55 = sbr.rel (0) target = $region25
    $region24: #{tpu_custom_call.1} parent=1 // pred_region
      %s57 = ssub.s32 1024, 1024
      %58 = vsyncadd [#allocation9], %s57
      %s59 = sshll.u32 [#allocation8], 4
      %s60 = int_to_ptr.vmem [resolvable:$true] %s59
      %65 = dma.hbm_to_vmem [thread:$0]  %s5, 1024, %s60, [#allocation9], 64, 64, 4
    $region25: #{tpu_custom_call.1} parent=1 // pred_fallthru
      _
    // Predicated region
    $region26: #{tpu_custom_call.1} parent=1 // pred_check
      _
    $region27: #{tpu_custom_call.1} parent=1 // pred_check_branch
      %67 = sbr.rel (0) target = $region29
    $region28: #{tpu_custom_call.1} parent=1 // pred_region
      _
    $region29: #{tpu_custom_call.1} parent=1 // pred_fallthru
      _
    // Predicated region
    $region30: #{tpu_custom_call.1} parent=1 // pred_check
      _
    $region31: #{tpu_custom_call.1} parent=1 // pred_check_branch
      %69 = sbr.rel (0) target = $region33
    $region32: #{tpu_custom_call.1} parent=1 // pred_region
      %70 = dma.done [#allocation3], 128
    $region33: #{tpu_custom_call.1} parent=1 // pred_fallthru
      _
    // Predicated region
    $region34: #{tpu_custom_call.1} parent=1 // pred_check
      _
    $region35: #{tpu_custom_call.1} parent=1 // pred_check_branch
      %72 = sbr.rel (0) target = $region37
    $region36: #{tpu_custom_call.1} parent=1 // pred_region
      %73 = dma.done [#allocation6], 1024
    $region37: #{tpu_custom_call.1} parent=1 // pred_fallthru
      _
    // Predicated region
    $region38: #{tpu_custom_call.1} parent=1 // pred_check
      _
    $region39: #{tpu_custom_call.1} parent=1 // pred_check_branch
      %75 = sbr.rel (0) target = $region41
    $region40: #{tpu_custom_call.1} parent=1 // pred_region
      %76 = dma.done [#allocation6], 1024
    $region41: #{tpu_custom_call.1} parent=1 // pred_fallthru
      _
    // Predicated region
    $region42: #{tpu_custom_call.1} parent=1 // pred_check
      _
    $region43: #{tpu_custom_call.1} parent=1 // pred_check_branch
      %78 = sbr.rel (0) target = $region45
    $region44: #{tpu_custom_call.1} parent=1 // pred_region
      %79 = dma.done [#allocation9], 1024
    $region45: #{tpu_custom_call.1} parent=1 // pred_fallthru
      _
    %v81 = vld [vmem:[#allocation2] sm:$0xff]
    %v82 = vld [vmem:[#allocation5] sm:$0xf]
    %v83 = vld [vmem:[#allocation5 + $0x4] sm:$0xf]
    %v84 = vld [vmem:[#allocation5 + $0x8] sm:$0xf]
    %v85 = vld [vmem:[#allocation5 + $0xc] sm:$0xf]
    %v86 = vld [vmem:[#allocation5 + $0x10] sm:$0xf]
    %v87 = vld [vmem:[#allocation5 + $0x14] sm:$0xf]
    %v88 = vld [vmem:[#allocation5 + $0x18] sm:$0xf]
    %v89 = vld [vmem:[#allocation5 + $0x1c] sm:$0xf]
    %v90 = vld [vmem:[#allocation5 + $0x20] sm:$0xf]
    %v91 = vld [vmem:[#allocation5 + $0x24] sm:$0xf]
    %v92 = vld [vmem:[#allocation5 + $0x28] sm:$0xf]
    %v93 = vld [vmem:[#allocation5 + $0x2c] sm:$0xf]
    %v94 = vld [vmem:[#allocation5 + $0x30] sm:$0xf]
    %v95 = vld [vmem:[#allocation5 + $0x34] sm:$0xf]
    %v96 = vld [vmem:[#allocation5 + $0x38] sm:$0xf]
    %v97 = vld [vmem:[#allocation5 + $0x3c] sm:$0xf]
    %v98 = vld [vmem:[%s2] sm:$0x7]
    %v99 = vpack.c.bf16 %v81, %v81
    %v100 = vlaneseq
    %v101 = vshrl.u32 %v100, 7
    %v102 = vsub.s32 0, %v101
    %v103 = vrot.slane %v98, %v102
    %v120 = vunpack.c.l.b16 %v82
    %v121 = vunpack.c.l.b16 %v83
    %v122 = vunpack.c.l.b16 %v84
    %v123 = vunpack.c.l.b16 %v85
    %v124 = vunpack.c.l.b16 %v86
    %v125 = vunpack.c.l.b16 %v87
    %v126 = vunpack.c.l.b16 %v88
    %v127 = vunpack.c.l.b16 %v89
    %v128 = vunpack.c.l.b16 %v90
    %v129 = vunpack.c.l.b16 %v91
    %v130 = vunpack.c.l.b16 %v92
    %v131 = vunpack.c.l.b16 %v93
    %v132 = vunpack.c.l.b16 %v94
    %v133 = vunpack.c.l.b16 %v95
    %v134 = vunpack.c.l.b16 %v96
    %v135 = vunpack.c.l.b16 %v97
    %v136 = vpack.c.b16 %v121, %v120
    %v137 = vpack.c.b16 %v123, %v122
    %v138 = vpack.c.b16 %v125, %v124
    %v139 = vpack.c.b16 %v127, %v126
    %v140 = vpack.c.b16 %v129, %v128
    %v141 = vpack.c.b16 %v131, %v130
    %v142 = vpack.c.b16 %v133, %v132
    %v143 = vpack.c.b16 %v135, %v134
    %152 = vmatprep.subr.bf16.mxu0 0
    %153 = vmatpush1.bf16.msra.mxu0 %v136
    %154 = vmatprep.subr.bf16.mxu0 0
    %155 = vmatpush1.bf16.msra.mxu0 %v137
    %156 = vmatprep.subr.bf16.mxu0 0
    %157 = vmatpush1.bf16.msra.mxu0 %v138
    %158 = vmatprep.subr.bf16.mxu0 0
    %159 = vmatpush1.bf16.msra.mxu0 %v139
    %160 = vmatprep.subr.bf16.mxu0 0
    %161 = vmatpush1.bf16.msra.mxu0 %v140
    %162 = vmatprep.subr.bf16.mxu0 0
    %163 = vmatpush1.bf16.msra.mxu0 %v141
    %164 = vmatprep.subr.bf16.mxu0 0
    %165 = vmatpush1.bf16.msra.mxu0 %v142
    %166 = vmatprep.subr.bf16.mxu0 0
    %167 = vmatpush1.bf16.msra.mxu0 %v143
    %168 = vmatprep.subr.bf16.mxu0 0
    %169 = vmatpush1.bf16.msra.mxu0 0
    %170 = vmatprep.subr.bf16.mxu0 0
    %171 = vmatpush1.bf16.msra.mxu0 0
    %172 = vmatprep.subr.bf16.mxu0 0
    %173 = vmatpush1.bf16.msra.mxu0 0
    %174 = vmatprep.subr.bf16.mxu0 0
    %175 = vmatpush1.bf16.msra.mxu0 0
    %176 = vmatprep.subr.bf16.mxu0 0
    %177 = vmatpush1.bf16.msra.mxu0 0
    %178 = vmatprep.subr.bf16.mxu0 0
    %179 = vmatpush1.bf16.msra.mxu0 0
    %180 = vmatprep.subr.bf16.mxu0 0
    %181 = vmatpush1.bf16.msra.mxu0 0
    %182 = vmatprep.subr.bf16.mxu0 0
    %183 = vmatpush1.bf16.msra.mxu0 0
    %184 = vmatprep.mubr.bf16.mxu0 0
    %185 = vmatmul.mubr.bf16.gmra.mrb[0].mxu0 %v99
    %v186 = vpop.f32.mrb[0].mxu0
    %v187 = vadd.f32 %v103, %v186
    %v188 = vpop.f32.mrb[0].mxu0
    %v189 = vpop.f32.mrb[0].mxu0
    %v190 = vpop.f32.mrb[0].mxu0
    %191 = vdwg.mxu0
    %192 = vadd.xlane.f32.xlu0 %v187
    %v193 = vpop.xlane.xlu0 %192
    %v194 = vmul.f32 %v193, 0.015625
    %v195 = vsub.f32 %v187, %v194
    %v196 = vlaneseq
    %v197 = vand.u32 %v196, 127
    %vm198 = vcmp.lt.s32.totalorder %v197, 64
    %v199 = vsel %vm198, 1, 0
    %v200 = vcvt.s32.f32 %v199
    %v201 = vmul.f32 %v195, %v200
    %v202 = vmul.f32 %v201, %v201
    %203 = vadd.xlane.f32.xlu0 %v202
    %v204 = vpop.xlane.xlu0 %203
    %v205 = vmul.f32 %v204, 0.015625
    %v206 = vadd.f32 %v205, 1e-05
    %v207 = vrsqrt.pop %v206
    %v208 = vmul.f32 %v201, %v207
    %v209 = vlaneseq
    %v210 = vshrl.u32 %v209, 7
    %v211 = vsub.s32 1, %v210
    %v212 = vrot.slane %v98, %v211
    %v213 = vmul.f32 %v208, %v212
    %v214 = vlaneseq
    %v215 = vshrl.u32 %v214, 7
    %v216 = vsub.s32 2, %v215
    %v217 = vrot.slane %v98, %v216
    %v218 = vadd.f32 %v213, %v217
    %v219 = vmax.f32 %v218, 0.0
    %v220 = vld [vmem:[#allocation7] sm:$0xf]
    %v221 = vld [vmem:[#allocation7 + $0x4] sm:$0xf]
    %v222 = vld [vmem:[#allocation7 + $0x8] sm:$0xf]
    %v223 = vld [vmem:[#allocation7 + $0xc] sm:$0xf]
    %v224 = vld [vmem:[#allocation7 + $0x10] sm:$0xf]
    %v225 = vld [vmem:[#allocation7 + $0x14] sm:$0xf]
    %v226 = vld [vmem:[#allocation7 + $0x18] sm:$0xf]
    %v227 = vld [vmem:[#allocation7 + $0x1c] sm:$0xf]
    %v228 = vld [vmem:[#allocation7 + $0x20] sm:$0xf]
    %v229 = vld [vmem:[#allocation7 + $0x24] sm:$0xf]
    %v230 = vld [vmem:[#allocation7 + $0x28] sm:$0xf]
    %v231 = vld [vmem:[#allocation7 + $0x2c] sm:$0xf]
    %v232 = vld [vmem:[#allocation7 + $0x30] sm:$0xf]
    %v233 = vld [vmem:[#allocation7 + $0x34] sm:$0xf]
    %v234 = vld [vmem:[#allocation7 + $0x38] sm:$0xf]
    %v235 = vld [vmem:[#allocation7 + $0x3c] sm:$0xf]
    %v236 = vld [vmem:[%s4] sm:$0x7]
    %v237 = vpack.c.bf16 %v219, %v219
    %v238 = vlaneseq
    %v239 = vshrl.u32 %v238, 7
    %v240 = vsub.s32 0, %v239
    %v241 = vrot.slane %v236, %v240
    %v258 = vunpack.c.l.b16 %v220
    %v259 = vunpack.c.l.b16 %v221
    %v260 = vunpack.c.l.b16 %v222
    %v261 = vunpack.c.l.b16 %v223
    %v262 = vunpack.c.l.b16 %v224
    %v263 = vunpack.c.l.b16 %v225
    %v264 = vunpack.c.l.b16 %v226
    %v265 = vunpack.c.l.b16 %v227
    %v266 = vunpack.c.l.b16 %v228
    %v267 = vunpack.c.l.b16 %v229
    %v268 = vunpack.c.l.b16 %v230
    %v269 = vunpack.c.l.b16 %v231
    %v270 = vunpack.c.l.b16 %v232
    %v271 = vunpack.c.l.b16 %v233
    %v272 = vunpack.c.l.b16 %v234
    %v273 = vunpack.c.l.b16 %v235
    %v274 = vpack.c.b16 %v259, %v258
    %v275 = vpack.c.b16 %v261, %v260
    %v276 = vpack.c.b16 %v263, %v262
    %v277 = vpack.c.b16 %v265, %v264
    %v278 = vpack.c.b16 %v267, %v266
    %v279 = vpack.c.b16 %v269, %v268
    %v280 = vpack.c.b16 %v271, %v270
    %v281 = vpack.c.b16 %v273, %v272
    %290 = vmatprep.subr.bf16.mxu0 0
    %291 = vmatpush1.bf16.msra.mxu0 %v274
    %292 = vmatprep.subr.bf16.mxu0 0
    %293 = vmatpush1.bf16.msra.mxu0 %v275
    %294 = vmatprep.subr.bf16.mxu0 0
    %295 = vmatpush1.bf16.msra.mxu0 %v276
    %296 = vmatprep.subr.bf16.mxu0 0
    %297 = vmatpush1.bf16.msra.mxu0 %v277
    %298 = vmatprep.subr.bf16.mxu0 0
    %299 = vmatpush1.bf16.msra.mxu0 %v278
    %300 = vmatprep.subr.bf16.mxu0 0
    %301 = vmatpush1.bf16.msra.mxu0 %v279
    %302 = vmatprep.subr.bf16.mxu0 0
    %303 = vmatpush1.bf16.msra.mxu0 %v280
    %304 = vmatprep.subr.bf16.mxu0 0
    %305 = vmatpush1.bf16.msra.mxu0 %v281
    %306 = vmatprep.subr.bf16.mxu0 0
    %307 = vmatpush1.bf16.msra.mxu0 0
    %308 = vmatprep.subr.bf16.mxu0 0
    %309 = vmatpush1.bf16.msra.mxu0 0
    %310 = vmatprep.subr.bf16.mxu0 0
    %311 = vmatpush1.bf16.msra.mxu0 0
    %312 = vmatprep.subr.bf16.mxu0 0
    %313 = vmatpush1.bf16.msra.mxu0 0
    %314 = vmatprep.subr.bf16.mxu0 0
    %315 = vmatpush1.bf16.msra.mxu0 0
    %316 = vmatprep.subr.bf16.mxu0 0
    %317 = vmatpush1.bf16.msra.mxu0 0
    %318 = vmatprep.subr.bf16.mxu0 0
    %319 = vmatpush1.bf16.msra.mxu0 0
    %320 = vmatprep.subr.bf16.mxu0 0
    %321 = vmatpush1.bf16.msra.mxu0 0
    %322 = vmatprep.mubr.bf16.mxu0 0
    %323 = vmatmul.mubr.bf16.gmra.mrb[0].mxu0 %v237
    %v324 = vpop.f32.mrb[0].mxu0
    %v325 = vadd.f32 %v241, %v324
    %v326 = vpop.f32.mrb[0].mxu0
    %v327 = vpop.f32.mrb[0].mxu0
    %v328 = vpop.f32.mrb[0].mxu0
    %329 = vdwg.mxu0
    %330 = vadd.xlane.f32.xlu0 %v325
    %v331 = vpop.xlane.xlu0 %330
    %v332 = vmul.f32 %v331, 0.03125
    %v333 = vsub.f32 %v325, %v332
    %vm334 = vcmp.lt.s32.totalorder %v197, 32
    %v335 = vsel %vm334, 1, 0
    %v336 = vcvt.s32.f32 %v335
    %v337 = vmul.f32 %v333, %v336
    %v338 = vmul.f32 %v337, %v337
    %339 = vadd.xlane.f32.xlu0 %v338
    %v340 = vpop.xlane.xlu0 %339
    %v341 = vmul.f32 %v340, 0.03125
    %v342 = vadd.f32 %v341, 1e-05
    %v343 = vrsqrt.pop %v342
    %v344 = vmul.f32 %v337, %v343
    %v345 = vlaneseq
    %v346 = vshrl.u32 %v345, 7
    %v347 = vsub.s32 1, %v346
    %v348 = vrot.slane %v236, %v347
    %v349 = vmul.f32 %v344, %v348
    %v350 = vlaneseq
    %v351 = vshrl.u32 %v350, 7
    %v352 = vsub.s32 2, %v351
    %v353 = vrot.slane %v236, %v352
    %v354 = vadd.f32 %v349, %v353
    %v355 = vmax.f32 %v354, 0.0
    %v356 = vld [vmem:[#allocation8] sm:$0xf]
    %v357 = vld [vmem:[#allocation8 + $0x4] sm:$0xf]
    %v358 = vld [vmem:[#allocation8 + $0x8] sm:$0xf]
    %v359 = vld [vmem:[#allocation8 + $0xc] sm:$0xf]
    %v360 = vld [vmem:[#allocation8 + $0x10] sm:$0xf]
    %v361 = vld [vmem:[#allocation8 + $0x14] sm:$0xf]
    %v362 = vld [vmem:[#allocation8 + $0x18] sm:$0xf]
    %v363 = vld [vmem:[#allocation8 + $0x1c] sm:$0xf]
    %v364 = vld [vmem:[#allocation8 + $0x20] sm:$0xf]
    %v365 = vld [vmem:[#allocation8 + $0x24] sm:$0xf]
    %v366 = vld [vmem:[#allocation8 + $0x28] sm:$0xf]
    %v367 = vld [vmem:[#allocation8 + $0x2c] sm:$0xf]
    %v368 = vld [vmem:[#allocation8 + $0x30] sm:$0xf]
    %v369 = vld [vmem:[#allocation8 + $0x34] sm:$0xf]
    %v370 = vld [vmem:[#allocation8 + $0x38] sm:$0xf]
    %v371 = vld [vmem:[#allocation8 + $0x3c] sm:$0xf]
    %v372 = vld [vmem:[%s6] sm:$0x1]
    %v373 = vpack.c.bf16 %v355, %v355
    %v375 = vlaneseq
    %v376 = vshrl.u32 %v375, 7
    %v377 = vsub.s32 0, %v376
    %v378 = vrot.slane %v372, %v377
    %v396 = vunpack.c.l.b16 %v356
    %v397 = vunpack.c.l.b16 %v357
    %v398 = vunpack.c.l.b16 %v358
    %v399 = vunpack.c.l.b16 %v359
    %v400 = vunpack.c.l.b16 %v360
    %v401 = vunpack.c.l.b16 %v361
    %v402 = vunpack.c.l.b16 %v362
    %v403 = vunpack.c.l.b16 %v363
    %v404 = vunpack.c.l.b16 %v364
    %v405 = vunpack.c.l.b16 %v365
    %v406 = vunpack.c.l.b16 %v366
    %v407 = vunpack.c.l.b16 %v367
    %v408 = vunpack.c.l.b16 %v368
    %v409 = vunpack.c.l.b16 %v369
    %v410 = vunpack.c.l.b16 %v370
    %v411 = vunpack.c.l.b16 %v371
    %v412 = vpack.c.b16 %v397, %v396
    %v413 = vpack.c.b16 %v399, %v398
    %v414 = vpack.c.b16 %v401, %v400
    %v415 = vpack.c.b16 %v403, %v402
    %v416 = vpack.c.b16 %v405, %v404
    %v417 = vpack.c.b16 %v407, %v406
    %v418 = vpack.c.b16 %v409, %v408
    %v419 = vpack.c.b16 %v411, %v410
    %428 = vmatprep.subr.bf16.mxu0 0
    %429 = vmatpush1.bf16.msra.mxu0 %v412
    %430 = vmatprep.subr.bf16.mxu0 0
    %431 = vmatpush1.bf16.msra.mxu0 %v413
    %432 = vmatprep.subr.bf16.mxu0 0
    %433 = vmatpush1.bf16.msra.mxu0 %v414
    %434 = vmatprep.subr.bf16.mxu0 0
    %435 = vmatpush1.bf16.msra.mxu0 %v415
    %436 = vmatprep.subr.bf16.mxu0 0
    %437 = vmatpush1.bf16.msra.mxu0 %v416
    %438 = vmatprep.subr.bf16.mxu0 0
    %439 = vmatpush1.bf16.msra.mxu0 %v417
    %440 = vmatprep.subr.bf16.mxu0 0
    %441 = vmatpush1.bf16.msra.mxu0 %v418
    %442 = vmatprep.subr.bf16.mxu0 0
    %443 = vmatpush1.bf16.msra.mxu0 %v419
    %444 = vmatprep.subr.bf16.mxu0 0
    %445 = vmatpush1.bf16.msra.mxu0 0
    %446 = vmatprep.subr.bf16.mxu0 0
    %447 = vmatpush1.bf16.msra.mxu0 0
    %448 = vmatprep.subr.bf16.mxu0 0
    %449 = vmatpush1.bf16.msra.mxu0 0
    %450 = vmatprep.subr.bf16.mxu0 0
    %451 = vmatpush1.bf16.msra.mxu0 0
    %452 = vmatprep.subr.bf16.mxu0 0
    %453 = vmatpush1.bf16.msra.mxu0 0
    %454 = vmatprep.subr.bf16.mxu0 0
    %455 = vmatpush1.bf16.msra.mxu0 0
    %456 = vmatprep.subr.bf16.mxu0 0
    %457 = vmatpush1.bf16.msra.mxu0 0
    %458 = vmatprep.subr.bf16.mxu0 0
    %459 = vmatpush1.bf16.msra.mxu0 0
    %460 = vmatprep.mubr.bf16.mxu0 0
    %461 = vmatmul.mubr.bf16.gmra.mrb[0].mxu0 %v373
    %v462 = vpop.f32.mrb[0].mxu0
    %v463 = vadd.f32 %v378, %v462
    %v464 = vpop.f32.mrb[0].mxu0
    %v465 = vpop.f32.mrb[0].mxu0
    %v466 = vpop.f32.mrb[0].mxu0
    %467 = vdwg.mxu0
    %468 = vst [vmem:[#allocation10] sm:$0xff] %v463
    // Predicated region
    $region46: #{tpu_custom_call.1} parent=1 // pred_check
      _
    $region47: #{tpu_custom_call.1} parent=1 // pred_check_branch
      %470 = sbr.rel (0) target = $region49
    $region48: #{tpu_custom_call.1} parent=1 // pred_region
      %s472 = ssub.s32 128, 128
      %473 = vsyncadd [#allocation4], %s472
      %s475 = sshll.u32 [#allocation10], 4
      %s476 = int_to_ptr.vmem [resolvable:$true] %s475
      %478 = dma.vmem_to_hbm [thread:$0]  %s476, 128, %s7, [#allocation4]
    $region49: #{tpu_custom_call.1} parent=1 // pred_fallthru
      _
    // Predicated region
    $region50: #{tpu_custom_call.1} parent=1 // pred_check
      _
    $region51: #{tpu_custom_call.1} parent=1 // pred_check_branch
      %480 = sbr.rel (0) target = $region53
    $region52: #{tpu_custom_call.1} parent=1 // pred_region
      %481 = dma.done [#allocation4], 128
    $region53: #{tpu_custom_call.1} parent=1 // pred_fallthru
      _
    %482 = vsyncpa [#allocation3], 1
    %483 = vsyncpa [#allocation6], 1
    %484 = vsyncpa [#allocation9], 1
    %485 = vsyncpa [#allocation4], 1

</llo_original>
